<compile_context>
chip_gen: v7x
topology: tpu7x:2x2x1
jax: 0.10.0
libtpu: 0.0.40
codegen_flags: <defaults>
</compile_context>

<pallas_src>
import jax
import jax.numpy as jnp
from jax.experimental import pallas as pl
from jax.experimental.pallas import tpu as pltpu


def _qnetwork_kernel(x_ref, w1_ref, b1_ref, w2_ref, b2_ref, o_ref):
    xT = x_ref[...]            # (n_state, TB)   batch on lanes
    w1 = w1_ref[...]           # (hidden, n_state)
    n_state = w1.shape[1]

    if n_state >= 64:
        # Large contraction: let the MXU do it.
        h = jnp.dot(w1, xT, preferred_element_type=jnp.float32) + b1_ref[...]
    else:
        # fc1 as an unrolled sum of rank-1 VPU terms (bias folded into term 0):
        #   h[j, b] = b1[j] + sum_k W1[j, k] * x[b, k]
        h = w1[:, 0:1] * xT[0:1, :] + b1_ref[...]
        for k in range(1, n_state):
            h = h + w1[:, k:k + 1] * xT[k:k + 1, :]
    h = jnp.maximum(h, 0.0)    # (hidden, TB)

    # fc2: weight the 20 sublane rows and reduce over the sublane axis
    # (a handful of VPU adds + small cross-sublane reduce; stays lane-dense).
    y = jnp.sum(h * w2_ref[...], axis=0, keepdims=True) + b2_ref[...]  # (1, TB)
    o_ref[...] = y.astype(o_ref.dtype)


def qnetwork_forward(x, w1, b1, w2, b2, *, block_b=1024):
    """QNetwork forward pass as a single Pallas kernel.

    x:  (B, n_state)
    w1: (hidden, n_state)  b1: (hidden,)      (PyTorch nn.Linear layout)
    w2: (1, hidden)        b2: (1,)
    returns (B, 1)
    """
    B, n_state = x.shape
    hidden = w1.shape[0]

    # Lane-dense layout: batch on the last (lane) axis.
    xT = x.T                               # (n_state, B)
    b1_col = b1.reshape(hidden, 1)         # broadcasts along lanes
    w2_col = w2.reshape(hidden, 1)         # broadcasts along lanes
    b2_2d = b2.reshape(1, 1)

    # Tile selection: whole batch when tiny; otherwise lane-aligned tiles,
    # >=2 tiles when possible (v7x dual TC), capped at block_b lanes.
    if B <= 128:
        TB = B
        n_tiles = 1
    else:
        half_rounded = ((pl.cdiv(B, 2) + 127) // 128) * 128
        TB = min(block_b, half_rounded)
        n_tiles = pl.cdiv(B, TB)           # ragged edge handled by Pallas

    cost = pl.CostEstimate(
        flops=2 * B * hidden * (n_state + 1),
        transcendentals=0,
        bytes_accessed=4 * (B * n_state + hidden * n_state + 2 * hidden + 1 + B),
    )

    out = pl.pallas_call(
        _qnetwork_kernel,
        out_shape=jax.ShapeDtypeStruct((1, B), x.dtype),
        grid=(n_tiles,),
        in_specs=[
            pl.BlockSpec((n_state, TB), lambda i: (0, i)),   # x^T tile
            pl.BlockSpec((hidden, n_state), lambda i: (0, 0)),  # W1 (resident)
            pl.BlockSpec((hidden, 1), lambda i: (0, 0)),        # b1 (resident)
            pl.BlockSpec((hidden, 1), lambda i: (0, 0)),        # W2 col (resident)
            pl.BlockSpec((1, 1), lambda i: (0, 0)),             # b2 (resident)
        ],
        out_specs=pl.BlockSpec((1, TB), lambda i: (0, i)),      # lane-dense out
        compiler_params=pltpu.CompilerParams(
            dimension_semantics=("parallel",)),
        cost_estimate=cost,
    )(xT, w1, b1_col, w2_col, b2_2d)

    return out.reshape(B, 1)


def init_qnetwork_params(key, n_state, n_action, hidden=20):
    """Deterministic init mimicking PyTorch nn.Linear defaults
    (uniform(-1/sqrt(fan_in), +1/sqrt(fan_in))), stored in PyTorch layout."""
    del n_action  # QNetwork's head is 1-wide regardless of n_action.
    k1, k2, k3, k4 = jax.random.split(key, 4)
    bound1 = 1.0 / jnp.sqrt(jnp.float32(n_state))
    bound2 = 1.0 / jnp.sqrt(jnp.float32(hidden))
    w1 = jax.random.uniform(k1, (hidden, n_state), jnp.float32, -bound1, bound1)
    b1 = jax.random.uniform(k2, (hidden,), jnp.float32, -bound1, bound1)
    w2 = jax.random.uniform(k3, (1, hidden), jnp.float32, -bound2, bound2)
    b2 = jax.random.uniform(k4, (1,), jnp.float32, -bound2, bound2)
    return w1, b1, w2, b2


def _ref_forward(x, w1, b1, w2, b2):
    return jnp.maximum(x @ w1.T + b1, 0.0) @ w2.T + b2


if __name__ == "__main__":
    key = jax.random.PRNGKey(0)
    k_x, k_p, k_big = jax.random.split(key, 3)

    n_state, n_action, hidden = 4, 2, 20
    w1, b1, w2, b2 = init_qnetwork_params(k_p, n_state, n_action, hidden)

    # 1) Small, module-consistent batch (single-tile path).
    B_small = 8
    x_small = jax.random.normal(k_x, (B_small, n_state), dtype=jnp.float32)
    y_small = jax.block_until_ready(qnetwork_forward(x_small, w1, b1, w2, b2))
    ref_small = _ref_forward(x_small, w1, b1, w2, b2)
    assert y_small.shape == (B_small, 1)
    assert jnp.allclose(y_small, ref_small, atol=1e-5, rtol=1e-5)

    # 2) Larger, non-multiple batch: gridded path with a ragged edge block
    #    (no jnp.pad; Pallas masks the writeback of the partial tile).
    B_big = 1000
    x_big = jax.random.normal(k_big, (B_big, n_state), dtype=jnp.float32)
    y_big = jax.block_until_ready(qnetwork_forward(x_big, w1, b1, w2, b2))
    ref_big = _ref_forward(x_big, w1, b1, w2, b2)
    assert y_big.shape == (B_big, 1)
    assert jnp.allclose(y_big, ref_big, atol=1e-5, rtol=1e-5)
    assert jnp.all(jnp.isfinite(y_big))

    print("KERNEL_OK")
</pallas_src>

<mosaic_0001>
module attributes {stable_mosaic.version = 11 : i64} {
  func.func @_qnetwork_kernel(%arg0: i32, %arg1: memref<4x8xf32, #tpu.memory_space<vmem>>, %arg2: memref<20x4xf32, #tpu.memory_space<vmem>>, %arg3: memref<20x1xf32, #tpu.memory_space<vmem>>, %arg4: memref<20x1xf32, #tpu.memory_space<vmem>>, %arg5: memref<1x1xf32, #tpu.memory_space<vmem>>, %arg6: memref<1x8xf32, #tpu.memory_space<vmem>>) attributes {dimension_semantics = [#tpu.dimension_semantics<parallel>], iteration_bounds = array<i64: 1>, scalar_prefetch = 0 : i64, scratch_operands = 0 : i64, tpu.core_type = #tpu.core_type<tc>, window_params = [{transform_indices = @transform_0, window_bounds = array<i64: 4, 8>}, {pipeline_mode = #tpu.pipeline_mode<synchronous>, transform_indices = @transform_1, window_bounds = array<i64: 20, 4>}, {pipeline_mode = #tpu.pipeline_mode<synchronous>, transform_indices = @transform_2, window_bounds = array<i64: 20, 1>}, {pipeline_mode = #tpu.pipeline_mode<synchronous>, transform_indices = @transform_3, window_bounds = array<i64: 20, 1>}, {pipeline_mode = #tpu.pipeline_mode<synchronous>, transform_indices = @transform_4, window_bounds = array<i64: 1, 1>}, {transform_indices = @transform_5, window_bounds = array<i64: 1, 8>}]} {
    %c0 = arith.constant 0 : index
    %c0_0 = arith.constant 0 : index
    %0 = vector.load %arg1[%c0, %c0_0] : memref<4x8xf32, #tpu.memory_space<vmem>>, vector<4x8xf32>
    %c0_1 = arith.constant 0 : index
    %c0_2 = arith.constant 0 : index
    %1 = vector.load %arg2[%c0_1, %c0_2] : memref<20x4xf32, #tpu.memory_space<vmem>>, vector<20x4xf32>
    %2 = vector.extract_strided_slice %1 {offsets = [0, 0], sizes = [20, 1], strides = [1, 1]} : vector<20x4xf32> to vector<20x1xf32>
    %3 = vector.extract_strided_slice %0 {offsets = [0, 0], sizes = [1, 8], strides = [1, 1]} : vector<4x8xf32> to vector<1x8xf32>
    %4 = vector.broadcast %2 : vector<20x1xf32> to vector<20x8xf32>
    %5 = vector.broadcast %3 : vector<1x8xf32> to vector<20x8xf32>
    %6 = arith.mulf %4, %5 : vector<20x8xf32>
    %c0_3 = arith.constant 0 : index
    %c0_4 = arith.constant 0 : index
    %7 = vector.load %arg3[%c0_3, %c0_4] : memref<20x1xf32, #tpu.memory_space<vmem>>, vector<20x1xf32>
    %8 = vector.broadcast %7 : vector<20x1xf32> to vector<20x8xf32>
    %9 = arith.addf %6, %8 : vector<20x8xf32>
    %10 = vector.extract_strided_slice %1 {offsets = [0, 1], sizes = [20, 1], strides = [1, 1]} : vector<20x4xf32> to vector<20x1xf32>
    %11 = vector.extract_strided_slice %0 {offsets = [1, 0], sizes = [1, 8], strides = [1, 1]} : vector<4x8xf32> to vector<1x8xf32>
    %12 = vector.broadcast %10 : vector<20x1xf32> to vector<20x8xf32>
    %13 = vector.broadcast %11 : vector<1x8xf32> to vector<20x8xf32>
    %14 = arith.mulf %12, %13 : vector<20x8xf32>
    %15 = arith.addf %9, %14 : vector<20x8xf32>
    %16 = vector.extract_strided_slice %1 {offsets = [0, 2], sizes = [20, 1], strides = [1, 1]} : vector<20x4xf32> to vector<20x1xf32>
    %17 = vector.extract_strided_slice %0 {offsets = [2, 0], sizes = [1, 8], strides = [1, 1]} : vector<4x8xf32> to vector<1x8xf32>
    %18 = vector.broadcast %16 : vector<20x1xf32> to vector<20x8xf32>
    %19 = vector.broadcast %17 : vector<1x8xf32> to vector<20x8xf32>
    %20 = arith.mulf %18, %19 : vector<20x8xf32>
    %21 = arith.addf %15, %20 : vector<20x8xf32>
    %22 = vector.extract_strided_slice %1 {offsets = [0, 3], sizes = [20, 1], strides = [1, 1]} : vector<20x4xf32> to vector<20x1xf32>
    %23 = vector.extract_strided_slice %0 {offsets = [3, 0], sizes = [1, 8], strides = [1, 1]} : vector<4x8xf32> to vector<1x8xf32>
    %24 = vector.broadcast %22 : vector<20x1xf32> to vector<20x8xf32>
    %25 = vector.broadcast %23 : vector<1x8xf32> to vector<20x8xf32>
    %26 = arith.mulf %24, %25 : vector<20x8xf32>
    %27 = arith.addf %21, %26 : vector<20x8xf32>
    %cst = arith.constant 0.000000e+00 : f32
    %28 = vector.broadcast %cst : f32 to vector<20x8xf32>
    %29 = arith.maximumf %27, %28 : vector<20x8xf32>
    %c0_5 = arith.constant 0 : index
    %c0_6 = arith.constant 0 : index
    %30 = vector.load %arg4[%c0_5, %c0_6] : memref<20x1xf32, #tpu.memory_space<vmem>>, vector<20x1xf32>
    %31 = vector.broadcast %30 : vector<20x1xf32> to vector<20x8xf32>
    %32 = arith.mulf %29, %31 : vector<20x8xf32>
    %cst_7 = arith.constant dense<0.000000e+00> : vector<8xf32>
    %33 = vector.multi_reduction <add>, %32, %cst_7 [0] : vector<20x8xf32> to vector<8xf32>
    %34 = vector.shape_cast %33 : vector<8xf32> to vector<1x8xf32>
    %c0_8 = arith.constant 0 : index
    %c0_9 = arith.constant 0 : index
    %35 = vector.load %arg5[%c0_8, %c0_9] : memref<1x1xf32, #tpu.memory_space<vmem>>, vector<1x1xf32>
    %36 = vector.broadcast %35 : vector<1x1xf32> to vector<1x8xf32>
    %37 = arith.addf %34, %36 : vector<1x8xf32>
    %c0_10 = arith.constant 0 : index
    %c0_11 = arith.constant 0 : index
    %38 = vector.load %arg6[%c0_10, %c0_11] : memref<1x8xf32, #tpu.memory_space<vmem>>, vector<1x8xf32>
    tpu.vector_store %arg6[%c0_10, %c0_11], %37 {strides = array<i32>} : memref<1x8xf32, #tpu.memory_space<vmem>>, vector<1x8xf32>,
    return
  }
  func.func @transform_0(%arg0: i32) -> (i32, i32) {
    %c0_i32 = arith.constant 0 : i32
    %c0_i32_0 = arith.constant 0 : i32
    return %c0_i32, %arg0 : i32, i32
  }
  func.func @transform_1(%arg0: i32) -> (i32, i32) {
    %c0_i32 = arith.constant 0 : i32
    %c0_i32_0 = arith.constant 0 : i32
    %c0_i32_1 = arith.constant 0 : i32
    return %c0_i32, %c0_i32_0 : i32, i32
  }
  func.func @transform_2(%arg0: i32) -> (i32, i32) {
    %c0_i32 = arith.constant 0 : i32
    %c0_i32_0 = arith.constant 0 : i32
    %c0_i32_1 = arith.constant 0 : i32
    return %c0_i32, %c0_i32_0 : i32, i32
  }
  func.func @transform_3(%arg0: i32) -> (i32, i32) {
    %c0_i32 = arith.constant 0 : i32
    %c0_i32_0 = arith.constant 0 : i32
    %c0_i32_1 = arith.constant 0 : i32
    return %c0_i32, %c0_i32_0 : i32, i32
  }
  func.func @transform_4(%arg0: i32) -> (i32, i32) {
    %c0_i32 = arith.constant 0 : i32
    %c0_i32_0 = arith.constant 0 : i32
    %c0_i32_1 = arith.constant 0 : i32
    return %c0_i32, %c0_i32_0 : i32, i32
  }
  func.func @transform_5(%arg0: i32) -> (i32, i32) {
    %c0_i32 = arith.constant 0 : i32
    %c0_i32_0 = arith.constant 0 : i32
    return %c0_i32, %arg0 : i32, i32
  }
}

</mosaic_0001>

<llo_original>
// kernel: tpu_custom_call.1
$region0: #{tpu_custom_call.1}
  #allocation0 [shape = 'u32[]', space=smem, size = 0x4, offset = 0x4, fixed_abs, tag = 'smem constant byte address 0x4 - core index']
  #allocation1 [shape = 'u32[144,128]{1,0:T(1,128)}', space=vmem, size = 0x12000, scoped, tag = 'internal scratch']
  #allocation2 [shape = 'f32[1,1]{1,0:T(1,128)S(1)}', space=vmem, size = 0x200, scoped, tag = 'scoped memory for tpu_custom_call.1']
  %s0 = inlined_call_operand.vmem [shape: f32[4,8], index: 0, kind: input, shape index: {}]
  %s1 = inlined_call_operand.vmem [shape: f32[20,4], index: 1, kind: input, shape index: {}]
  %s2 = inlined_call_operand.vmem [shape: f32[20,1], index: 2, kind: input, shape index: {}]
  %s3 = inlined_call_operand.vmem [shape: f32[20,1], index: 3, kind: input, shape index: {}]
  %s4 = inlined_call_operand.<no memory space> [shape: f32[1,1], index: 4, kind: input, shape index: {}]
  %s5 = inlined_call_operand.hbm [shape: f32[1,8], index: 5, kind: output, shape index: {}]
  %s6 = sld [smem:[#allocation0]]
  $region30: #{tpu_custom_call.1} parent=0
    _
  %s8 = ssub.s32 1, %s6
  %s9 = scalar_select 0, %s8, %s6
  %v10 = vstv %s4
  %11 = vst [vmem:[#allocation2] sm:$0x1] %v10
  $region1: #{tpu_custom_call.1} parent=0
    #allocation3 [shape = 'u8[512]{0}', space=vmem, size = 0x400, scoped, tag = 'output window, operand 0, single buffered']
    #allocation4 [shape = 's32[1]{0}', space=sflag, size = 0x4, scoped, tag = 'scoped memory for tpu_custom_call.1']
    %12 = vsyncpa [#allocation4], 0
    // Predicated region
    $region2: #{tpu_custom_call.1} parent=1 // pred_check
      _
    $region3: #{tpu_custom_call.1} parent=1 // pred_check_branch
      %14 = sbr.rel (0) target = $region5
    $region4: #{tpu_custom_call.1} parent=1 // pred_region
      _
    $region5: #{tpu_custom_call.1} parent=1 // pred_fallthru
      _
    // Predicated region
    $region6: #{tpu_custom_call.1} parent=1 // pred_check
      _
    $region7: #{tpu_custom_call.1} parent=1 // pred_check_branch
      %16 = sbr.rel (0) target = $region9
    $region8: #{tpu_custom_call.1} parent=1 // pred_region
      _
    $region9: #{tpu_custom_call.1} parent=1 // pred_fallthru
      _
    // Predicated region
    $region10: #{tpu_custom_call.1} parent=1 // pred_check
      _
    $region11: #{tpu_custom_call.1} parent=1 // pred_check_branch
      %18 = sbr.rel (0) target = $region13
    $region12: #{tpu_custom_call.1} parent=1 // pred_region
      _
    $region13: #{tpu_custom_call.1} parent=1 // pred_fallthru
      _
    // Predicated region
    $region14: #{tpu_custom_call.1} parent=1 // pred_check
      _
    $region15: #{tpu_custom_call.1} parent=1 // pred_check_branch
      %20 = sbr.rel (0) target = $region17
    $region16: #{tpu_custom_call.1} parent=1 // pred_region
      _
    $region17: #{tpu_custom_call.1} parent=1 // pred_fallthru
      _
    // Predicated region
    $region18: #{tpu_custom_call.1} parent=1 // pred_check
      _
    $region19: #{tpu_custom_call.1} parent=1 // pred_check_branch
      %22 = sbr.rel (0) target = $region21
    $region20: #{tpu_custom_call.1} parent=1 // pred_region
      _
    $region21: #{tpu_custom_call.1} parent=1 // pred_fallthru
      _
    %v23 = vld [vmem:[%s0] sm:$0xf]
    %v24 = vld [vmem:[%s1] sm:$0xff]
    %v25 = vld [vmem:[%s1 + $0x8] sm:$0xff]
    %v26 = vld [vmem:[%s1 + $0x10] sm:$0xf]
    %28 = vset.pattern.permute.xlu0 0
    %29 = vperm.xlu0 %28, %v24
    %v30 = vpop.permute.xlu0 %29
    %33 = vset.pattern.permute.xlu0 0
    %34 = vperm.xlu0 %33, %v25
    %v35 = vpop.permute.xlu0 %34
    %38 = vset.pattern.permute.xlu0 0
    %39 = vperm.xlu0 %38, %v26
    %v40 = vpop.permute.xlu0 %39
    %v42 = vlaneseq
    %v43 = vshrl.u32 %v42, 7
    %v44 = vsub.s32 0, %v43
    %v45 = vrot.slane %v23, %v44
    %v46 = vmul.f32 %v30, %v45
    %v47 = vmul.f32 %v35, %v45
    %v48 = vmul.f32 %v40, %v45
    %v49 = vld [vmem:[%s2] sm:$0xff]
    %v50 = vld [vmem:[%s2 + $0x8] sm:$0xff]
    %v51 = vld [vmem:[%s2 + $0x10] sm:$0xf]
    %53 = vset.pattern.permute.xlu0 0
    %54 = vperm.xlu0 %53, %v49
    %v55 = vpop.permute.xlu0 %54
    %58 = vset.pattern.permute.xlu0 0
    %59 = vperm.xlu0 %58, %v50
    %v60 = vpop.permute.xlu0 %59
    %63 = vset.pattern.permute.xlu0 0
    %64 = vperm.xlu0 %63, %v51
    %v65 = vpop.permute.xlu0 %64
    %v67 = vadd.f32 %v46, %v55
    %v68 = vadd.f32 %v47, %v60
    %v69 = vadd.f32 %v48, %v65
    %70 = vset.pattern.permute.xlu0 1
    %71 = vperm.xlu0 %70, %v24
    %v72 = vpop.permute.xlu0 %71
    %74 = vset.pattern.permute.xlu0 1
    %75 = vperm.xlu0 %74, %v25
    %v76 = vpop.permute.xlu0 %75
    %78 = vset.pattern.permute.xlu0 1
    %79 = vperm.xlu0 %78, %v26
    %v80 = vpop.permute.xlu0 %79
    %v82 = vlaneseq
    %v83 = vshrl.u32 %v82, 7
    %v84 = vsub.s32 1, %v83
    %v85 = vrot.slane %v23, %v84
    %v86 = vmul.f32 %v72, %v85
    %v87 = vmul.f32 %v76, %v85
    %v88 = vmul.f32 %v80, %v85
    %v89 = vadd.f32 %v67, %v86
    %v90 = vadd.f32 %v68, %v87
    %v91 = vadd.f32 %v69, %v88
    %92 = vset.pattern.permute.xlu0 2
    %93 = vperm.xlu0 %92, %v24
    %v94 = vpop.permute.xlu0 %93
    %96 = vset.pattern.permute.xlu0 2
    %97 = vperm.xlu0 %96, %v25
    %v98 = vpop.permute.xlu0 %97
    %100 = vset.pattern.permute.xlu0 2
    %101 = vperm.xlu0 %100, %v26
    %v102 = vpop.permute.xlu0 %101
    %v104 = vlaneseq
    %v105 = vshrl.u32 %v104, 7
    %v106 = vsub.s32 2, %v105
    %v107 = vrot.slane %v23, %v106
    %v108 = vmul.f32 %v94, %v107
    %v109 = vmul.f32 %v98, %v107
    %v110 = vmul.f32 %v102, %v107
    %v111 = vadd.f32 %v89, %v108
    %v112 = vadd.f32 %v90, %v109
    %v113 = vadd.f32 %v91, %v110
    %114 = vset.pattern.permute.xlu0 3
    %115 = vperm.xlu0 %114, %v24
    %v116 = vpop.permute.xlu0 %115
    %118 = vset.pattern.permute.xlu0 3
    %119 = vperm.xlu0 %118, %v25
    %v120 = vpop.permute.xlu0 %119
    %122 = vset.pattern.permute.xlu0 3
    %123 = vperm.xlu0 %122, %v26
    %v124 = vpop.permute.xlu0 %123
    %v126 = vlaneseq
    %v127 = vshrl.u32 %v126, 7
    %v128 = vsub.s32 3, %v127
    %v129 = vrot.slane %v23, %v128
    %v130 = vmul.f32 %v116, %v129
    %v131 = vmul.f32 %v120, %v129
    %v132 = vmul.f32 %v124, %v129
    %v133 = vadd.f32 %v111, %v130
    %v134 = vadd.f32 %v112, %v131
    %v135 = vadd.f32 %v113, %v132
    %v136 = vmax.f32 %v133, 0.0
    %v137 = vmax.f32 %v134, 0.0
    %v138 = vmax.f32 %v135, 0.0
    %v139 = vld [vmem:[%s3] sm:$0xff]
    %v140 = vld [vmem:[%s3 + $0x8] sm:$0xff]
    %v141 = vld [vmem:[%s3 + $0x10] sm:$0xf]
    %143 = vset.pattern.permute.xlu0 0
    %144 = vperm.xlu0 %143, %v139
    %v145 = vpop.permute.xlu0 %144
    %148 = vset.pattern.permute.xlu0 0
    %149 = vperm.xlu0 %148, %v140
    %v150 = vpop.permute.xlu0 %149
    %153 = vset.pattern.permute.xlu0 0
    %154 = vperm.xlu0 %153, %v141
    %v155 = vpop.permute.xlu0 %154
    %v157 = vmul.f32 %v136, %v145
    %v158 = vmul.f32 %v137, %v150
    %v159 = vmul.f32 %v138, %v155
    %vm160 = vcmask 64512
    %v161 = vsel %vm160, %v157, 0.0
    %v162 = vsel %vm160, %v158, 0.0
    %v163 = vadd.f32 %v161, %v162
    %vm164 = vcmask 60416
    %v165 = vsel %vm164, %v159, 0.0
    %v166 = vadd.f32 %v163, %v165
    %v167 = vrot.slane %v166, 4
    %v168 = vadd.f32 %v166, %v167
    %v169 = vrot.slane %v168, 2
    %v170 = vadd.f32 %v168, %v169
    %v171 = vrot.slane %v170, 1
    %v172 = vadd.f32 %v170, %v171
    %v173 = vld [vmem:[#allocation2] sm:$0x1]
    %175 = vset.pattern.permute.xlu0 0
    %176 = vperm.xlu0 %175, %v173
    %v177 = vpop.permute.xlu0 %176
    %v179 = vlaneseq
    %v180 = vshrl.u32 %v179, 7
    %v181 = vsub.s32 0, %v180
    %v182 = vrot.slane %v177, %v181
    %v183 = vadd.f32 %v172, %v182
    %vm184 = vcmask 57344
    %185 = vst.msk [vmem:[#allocation3] sm:$0x1] %vm184, %v183
    // Predicated region
    $region22: #{tpu_custom_call.1} parent=1 // pred_check
      _
    $region23: #{tpu_custom_call.1} parent=1 // pred_check_branch
      %187 = sbr.rel (0) target = $region25
    $region24: #{tpu_custom_call.1} parent=1 // pred_region
      %s189 = ssub.s32 16, 16
      %190 = vsyncadd [#allocation4], %s189
      %s192 = sshll.u32 [#allocation3], 4
      %s193 = int_to_ptr.vmem [resolvable:$true] %s192
      %195 = dma.vmem_to_hbm [thread:$0]  %s193, 16, %s5, [#allocation4]
    $region25: #{tpu_custom_call.1} parent=1 // pred_fallthru
      _
    // Predicated region
    $region26: #{tpu_custom_call.1} parent=1 // pred_check
      _
    $region27: #{tpu_custom_call.1} parent=1 // pred_check_branch
      %197 = sbr.rel (0) target = $region29
    $region28: #{tpu_custom_call.1} parent=1 // pred_region
      %198 = dma.done [#allocation4], 16
    $region29: #{tpu_custom_call.1} parent=1 // pred_fallthru
      _
    %199 = vsyncpa [#allocation4], 1

</llo_original>
